<compile_context>
chip_gen: v7x
topology: tpu7x:2x2x1
jax: 0.10.0
libtpu: 0.0.40
codegen_flags: <defaults>
</compile_context>

<pallas_src>
import functools

import jax
import jax.numpy as jnp
from jax.experimental import pallas as pl
from jax.experimental.pallas import tpu as pltpu


# ---------------------------------------------------------------------------
# PE table construction (matches the torch buffer in __init__ exactly).
# ---------------------------------------------------------------------------
def _build_positional_enc(max_seq_len: int, dimension: int) -> jnp.ndarray:
    den = jnp.power(
        10000.0,
        (jnp.arange(0, dimension // 2, dtype=jnp.float32) * 2.0) / float(dimension),
    )  # (dim/2,)
    num = jnp.arange(0, max_seq_len, dtype=jnp.float32)[:, None]  # (L, 1)
    angles = num / den  # (L, dim/2)
    pe = jnp.zeros((max_seq_len, dimension), dtype=jnp.float32)
    pe = pe.at[:, 0::2].set(jnp.sin(angles))
    pe = pe.at[:, 1::2].set(jnp.cos(angles))
    return pe[None, :, :]  # (1, L, dim)


# ---------------------------------------------------------------------------
# Kernels.  Blocks are lane-dense; the add is done in f32.
# ---------------------------------------------------------------------------
def _pe_add_kernel(x_ref, pe_ref, o_ref):
    # pe_ref block may have a leading dim of 1 -> broadcasts over the batch dim.
    o_ref[...] = (x_ref[...].astype(jnp.float32) + pe_ref[...]).astype(o_ref.dtype)


def _pe_add_dropout_kernel(seed_ref, x_ref, pe_ref, o_ref, *,
                           drop_threshold, scale, grid_rank):
    # Per-tile seed derived from the flat grid index so every tile draws an
    # independent stream.  (Mask will not match torch.nn.Dropout bit-for-bit;
    # statistics are identical.  Use pltpu.sample_block for grid-invariance.)
    if grid_rank == 1:
        tile_id = pl.program_id(0)
    else:
        tile_id = pl.program_id(0) * pl.num_programs(1) + pl.program_id(1)
    pltpu.prng_seed(seed_ref[0] + tile_id)
    bits = pltpu.prng_random_bits(x_ref.shape)
    if bits.dtype != jnp.uint32:
        bits = pltpu.bitcast(bits, jnp.uint32)
    y = x_ref[...].astype(jnp.float32) + pe_ref[...]
    # Integer-threshold dropout: P(bits < thr) = p  ->  keep iff bits >= thr.
    keep = bits >= jnp.uint32(drop_threshold)
    o_ref[...] = jnp.where(keep, y * jnp.float32(scale), 0.0).astype(o_ref.dtype)


def _pe_add_dropout_bits_kernel(x_ref, pe_ref, bits_ref, o_ref, *,
                                drop_threshold, scale):
    # Fallback (non-TPU / interpret only): mask bits streamed from the wrapper.
    y = x_ref[...].astype(jnp.float32) + pe_ref[...]
    keep = bits_ref[...] >= jnp.uint32(drop_threshold)
    o_ref[...] = jnp.where(keep, y * jnp.float32(scale), 0.0).astype(o_ref.dtype)


# ---------------------------------------------------------------------------
# Tiling policy.
# ---------------------------------------------------------------------------
_MAX_TILE_ELEMS_CAP = 768 * 1024   # 3 MiB per f32 buffer, hard cap
_MIN_TILE_ELEMS = 128 * 1024       # never go below 512 KiB/buffer for the cap
_MIN_SPLIT_ELEMS = 128 * 1024      # don't shrink tiles below this just to add steps
_MIN_GRID_STEPS = 4                # enough steps to feed both v7x TensorCores


def _max_tile_elems() -> int:
    """Tile-size cap (in f32 elements) sized against this chip's VMEM."""
    try:
        vmem_cap = int(pltpu.get_tpu_info().vmem_capacity_bytes)
    except Exception:
        vmem_cap = 64 << 20  # v7x-sized conservative default
    # 3 f32 streams (x, pe, out), double-buffered, ~4x headroom.
    budget = vmem_cap // (3 * 2 * 4 * 4)
    return max(_MIN_TILE_ELEMS, min(_MAX_TILE_ELEMS_CAP, budget))


# ---------------------------------------------------------------------------
# Wrapper.
# ---------------------------------------------------------------------------
def positional_encoding_forward(
    x: jnp.ndarray,
    positional_enc: jnp.ndarray,
    *,
    dropout_p: float = 0.1,
    training: bool = False,
    rng_key=None,
) -> jnp.ndarray:
    """x: (B, S, D).  positional_enc: (1, max_seq_len, D) float32."""
    B, S, D = x.shape
    orig_dtype = x.dtype
    N = S * D
    N_pad = ((N + 127) // 128) * 128  # lane-dense even when S*D % 128 != 0

    lane = next(c for c in (2048, 1024, 512, 256, 128) if N_pad % c == 0)
    R = N_pad // lane

    # ---- flatten (+ pad if needed) x and the exact PE slice to (.., R, lane).
    pe_flat = positional_enc[:, :S, :].astype(jnp.float32).reshape(1, N)
    if N_pad == N:
        x_k = x.reshape(B, R, lane)
        pe_k = pe_flat.reshape(1, R, lane)
    else:
        pad = N_pad - N
        x_k = jnp.pad(x.reshape(B, N), ((0, 0), (0, pad))).reshape(B, R, lane)
        pe_k = jnp.pad(pe_flat, ((0, 0), (0, pad))).reshape(1, R, lane)

    # ---- tile / grid selection.
    max_tile = _max_tile_elems()
    per_batch = R * lane

    if per_batch <= max_tile:
        # Mode A: block across the batch axis; PE block resident for the whole grid.
        tile_b = min(B, max(1, max_tile // per_batch))
        while (pl.cdiv(B, tile_b) < _MIN_GRID_STEPS and tile_b > 1
               and (tile_b // 2) * per_batch >= _MIN_SPLIT_ELEMS):
            tile_b = max(1, tile_b // 2)
        grid = (pl.cdiv(B, tile_b),)
        blk_x = (tile_b, R, lane)
        blk_pe = (1, R, lane)
        tile_elems = tile_b * per_batch
        x_map = lambda gb: (gb, 0, 0)
        pe_map = lambda gb: (0, 0, 0)
        x_map_p = lambda gb, seed: (gb, 0, 0)
        pe_map_p = lambda gb, seed: (0, 0, 0)
    else:
        # Mode B: tile the flattened row axis; row-tile axis OUTERMOST so the
        # PE block is not re-fetched across the inner batch steps.
        max_rows = max(8, (max_tile // lane) // 8 * 8)
        tile_rows = max_rows
        n_tiles = pl.cdiv(R, tile_rows)
        while (n_tiles * B < _MIN_GRID_STEPS and tile_rows > 8
               and (tile_rows // 2) * lane >= _MIN_SPLIT_ELEMS):
            tile_rows = max(8, (tile_rows // 2) // 8 * 8)
            n_tiles = pl.cdiv(R, tile_rows)
        grid = (n_tiles, B)
        blk_x = (1, tile_rows, lane)
        blk_pe = (1, tile_rows, lane)
        tile_elems = tile_rows * lane
        x_map = lambda t, b: (b, t, 0)
        pe_map = lambda t, b: (0, t, 0)
        x_map_p = lambda t, b, seed: (b, t, 0)
        pe_map_p = lambda t, b, seed: (0, t, 0)

    grid_rank = len(grid)
    n_streams = 3  # x, pe, out (dropout bits no longer stream from HBM on TPU)
    vmem_limit = int(min(48 << 20,
                         max(24 << 20, 2 * n_streams * tile_elems * 4 + (8 << 20))))
    cparams = pltpu.CompilerParams(
        dimension_semantics=("parallel",) * grid_rank,
        vmem_limit_bytes=vmem_limit,
    )
    out_shape = jax.ShapeDtypeStruct((B, R, lane), orig_dtype)

    if not (training and dropout_p > 0.0):
        out = pl.pallas_call(
            _pe_add_kernel,
            out_shape=out_shape,
            grid=grid,
            in_specs=[pl.BlockSpec(blk_x, x_map), pl.BlockSpec(blk_pe, pe_map)],
            out_specs=pl.BlockSpec(blk_x, x_map),
            compiler_params=cparams,
        )(x_k, pe_k)
    else:
        if rng_key is None:
            rng_key = jax.random.PRNGKey(0)
        scale = 1.0 / (1.0 - float(dropout_p))
        thr = min(int(round(float(dropout_p) * (1 << 32))), (1 << 32) - 1)
        on_tpu = jax.devices()[0].platform == "tpu"
        if on_tpu:
            # In-kernel hardware PRNG; only a single int32 seed crosses HBM.
            seed = jax.random.randint(rng_key, (1,), 0,
                                      jnp.iinfo(jnp.int32).max, dtype=jnp.int32)
            kernel = functools.partial(
                _pe_add_dropout_kernel,
                drop_threshold=thr, scale=scale, grid_rank=grid_rank)
            out = pl.pallas_call(
                kernel,
                out_shape=out_shape,
                grid_spec=pltpu.PrefetchScalarGridSpec(
                    num_scalar_prefetch=1,
                    grid=grid,
                    in_specs=[pl.BlockSpec(blk_x, x_map_p),
                              pl.BlockSpec(blk_pe, pe_map_p)],
                    out_specs=pl.BlockSpec(blk_x, x_map_p),
                ),
                compiler_params=cparams,
            )(seed, x_k, pe_k)
        else:
            # Portable fallback (interpret / CPU): stream mask bits from HBM.
            bits = jax.random.bits(rng_key, (B, R, lane), dtype=jnp.uint32)
            kernel = functools.partial(
                _pe_add_dropout_bits_kernel, drop_threshold=thr, scale=scale)
            out = pl.pallas_call(
                kernel,
                out_shape=out_shape,
                grid=grid,
                in_specs=[pl.BlockSpec(blk_x, x_map),
                          pl.BlockSpec(blk_pe, pe_map),
                          pl.BlockSpec(blk_x, x_map)],
                out_specs=pl.BlockSpec(blk_x, x_map),
                compiler_params=cparams,
            )(x_k, pe_k, bits)

    if N_pad == N:
        return out.reshape(B, S, D)
    return out.reshape(B, N_pad)[:, :N].reshape(B, S, D)


if __name__ == "__main__":
    # Small shapes consistent with the module: batch=2, seq=8, dim=32.
    max_seq_len, dim = 16, 32
    B, S = 2, 8

    key = jax.random.PRNGKey(0)
    x = jax.random.normal(key, (B, S, dim), dtype=jnp.float32)
    pe = _build_positional_enc(max_seq_len, dim)
    ref = x + pe[:, :S, :]

    # Eval mode (dropout = identity): must match x + pe[:, :S] exactly.
    out_eval = jax.block_until_ready(
        positional_encoding_forward(x, pe, dropout_p=0.1, training=False))
    assert out_eval.shape == (B, S, dim)
    assert jnp.allclose(out_eval, ref, atol=1e-6), "eval-mode mismatch vs reference"

    # Padded lane-dense path (S*D not a multiple of 128): eval correctness.
    dim2 = 24
    pe2 = _build_positional_enc(max_seq_len, dim2)
    x2 = jax.random.normal(jax.random.PRNGKey(2), (B, S, dim2), dtype=jnp.float32)
    out2 = jax.block_until_ready(positional_encoding_forward(x2, pe2, training=False))
    assert out2.shape == (B, S, dim2)
    assert jnp.allclose(out2, x2 + pe2[:, :S, :], atol=1e-6), "padded-path mismatch"

    # Training mode (dropout active, in-kernel TPU PRNG, deterministic seed).
    # TODO(synk): mask bits will not match torch.nn.Dropout's RNG stream
    # bit-for-bit (statistics are identical; eval mode is exact).
    out_train = jax.block_until_ready(
        positional_encoding_forward(
            x, pe, dropout_p=0.1, training=True, rng_key=jax.random.PRNGKey(1234)))
    kept = out_train != 0.0
    scaled_ref = ref / 0.9
    assert jnp.allclose(
        jnp.where(kept, out_train, scaled_ref), scaled_ref, atol=1e-5
    ), "training-mode kept-element scaling mismatch"
    keep_frac = float(jnp.mean(kept.astype(jnp.float32)))
    assert 0.5 <= keep_frac <= 1.0, "training-mode keep-rate implausible"

    print("KERNEL_OK")
</pallas_src>

<mosaic_0001>
module attributes {stable_mosaic.version = 11 : i64} {
  func.func @_pe_add_kernel(%arg0: i32, %arg1: memref<2x1x256xf32, #tpu.memory_space<vmem>>, %arg2: memref<1x1x256xf32, #tpu.memory_space<vmem>>, %arg3: memref<2x1x256xf32, #tpu.memory_space<vmem>>) attributes {dimension_semantics = [#tpu.dimension_semantics<parallel>], iteration_bounds = array<i64: 1>, scalar_prefetch = 0 : i64, scratch_operands = 0 : i64, tpu.core_type = #tpu.core_type<tc>, window_params = [{transform_indices = @transform_0, window_bounds = array<i64: 2, 1, 256>}, {pipeline_mode = #tpu.pipeline_mode<synchronous>, transform_indices = @transform_1, window_bounds = array<i64: 1, 1, 256>}, {transform_indices = @transform_2, window_bounds = array<i64: 2, 1, 256>}]} {
    %c0 = arith.constant 0 : index
    %c0_0 = arith.constant 0 : index
    %c0_1 = arith.constant 0 : index
    %0 = vector.load %arg1[%c0, %c0_0, %c0_1] : memref<2x1x256xf32, #tpu.memory_space<vmem>>, vector<2x1x256xf32>
    %c0_2 = arith.constant 0 : index
    %c0_3 = arith.constant 0 : index
    %c0_4 = arith.constant 0 : index
    %1 = vector.load %arg2[%c0_2, %c0_3, %c0_4] : memref<1x1x256xf32, #tpu.memory_space<vmem>>, vector<1x1x256xf32>
    %2 = vector.broadcast %1 : vector<1x1x256xf32> to vector<2x1x256xf32>
    %3 = arith.addf %0, %2 : vector<2x1x256xf32>
    %c0_5 = arith.constant 0 : index
    %c0_6 = arith.constant 0 : index
    %c0_7 = arith.constant 0 : index
    %4 = vector.load %arg3[%c0_5, %c0_6, %c0_7] : memref<2x1x256xf32, #tpu.memory_space<vmem>>, vector<2x1x256xf32>
    tpu.vector_store %arg3[%c0_5, %c0_6, %c0_7], %3 {strides = array<i32>} : memref<2x1x256xf32, #tpu.memory_space<vmem>>, vector<2x1x256xf32>,
    return
  }
  func.func @transform_0(%arg0: i32) -> (i32, i32, i32) {
    %c0_i32 = arith.constant 0 : i32
    %c0_i32_0 = arith.constant 0 : i32
    %c0_i32_1 = arith.constant 0 : i32
    return %arg0, %c0_i32, %c0_i32_0 : i32, i32, i32
  }
  func.func @transform_1(%arg0: i32) -> (i32, i32, i32) {
    %c0_i32 = arith.constant 0 : i32
    %c0_i32_0 = arith.constant 0 : i32
    %c0_i32_1 = arith.constant 0 : i32
    %c0_i32_2 = arith.constant 0 : i32
    return %c0_i32, %c0_i32_0, %c0_i32_1 : i32, i32, i32
  }
  func.func @transform_2(%arg0: i32) -> (i32, i32, i32) {
    %c0_i32 = arith.constant 0 : i32
    %c0_i32_0 = arith.constant 0 : i32
    %c0_i32_1 = arith.constant 0 : i32
    return %arg0, %c0_i32, %c0_i32_0 : i32, i32, i32
  }
}

</mosaic_0001>

<llo_original>
// kernel: tpu_custom_call.1
$region0: #{tpu_custom_call.1}
  #allocation0 [shape = 'u32[]', space=smem, size = 0x4, offset = 0x4, fixed_abs, tag = 'smem constant byte address 0x4 - core index']
  #allocation1 [shape = 'u32[144,128]{1,0:T(1,128)}', space=vmem, size = 0x12000, scoped, tag = 'internal scratch']
  %s0 = inlined_call_operand.hbm [shape: f32[2,1,256], index: 0, kind: input, shape index: {}]
  %s1 = inlined_call_operand.vmem [shape: f32[1,1,256], index: 1, kind: input, shape index: {}]
  %s2 = inlined_call_operand.hbm [shape: f32[2,1,256], index: 2, kind: output, shape index: {}]
  %s3 = sld [smem:[#allocation0]]
  $region22: #{tpu_custom_call.1} parent=0
    _
  %s5 = ssub.s32 1, %s3
  %s6 = scalar_select 0, %s5, %s3
  $region1: #{tpu_custom_call.1} parent=0
    #allocation2 [shape = 'u8[2048]{0}', space=vmem, size = 0x800, scoped, tag = 'input window, operand 0, single buffered']
    #allocation3 [shape = 's32[1]{0}', space=sflag, size = 0x4, scoped, tag = 'scoped memory for tpu_custom_call.1']
    #allocation4 [shape = 's32[1]{0}', space=sflag, size = 0x4, scoped, tag = 'scoped memory for tpu_custom_call.1']
    #allocation5 [shape = 'u8[2048]{0}', space=vmem, size = 0x800, scoped, tag = 'output window, operand 0, single buffered']
    %7 = vsyncpa [#allocation3], 0
    %8 = vsyncpa [#allocation4], 0
    // Predicated region
    $region2: #{tpu_custom_call.1} parent=1 // pred_check
      _
    $region3: #{tpu_custom_call.1} parent=1 // pred_check_branch
      %10 = sbr.rel (0) target = $region5
    $region4: #{tpu_custom_call.1} parent=1 // pred_region
      %s12 = ssub.s32 64, 64
      %13 = vsyncadd [#allocation3], %s12
      %s14 = sshll.u32 [#allocation2], 4
      %s15 = int_to_ptr.vmem [resolvable:$true] %s14
      %20 = dma.hbm_to_vmem [thread:$0]  %s0, 64, %s15, [#allocation3], 32, 32, 2
    $region5: #{tpu_custom_call.1} parent=1 // pred_fallthru
      _
    // Predicated region
    $region6: #{tpu_custom_call.1} parent=1 // pred_check
      _
    $region7: #{tpu_custom_call.1} parent=1 // pred_check_branch
      %22 = sbr.rel (0) target = $region9
    $region8: #{tpu_custom_call.1} parent=1 // pred_region
      _
    $region9: #{tpu_custom_call.1} parent=1 // pred_fallthru
      _
    // Predicated region
    $region10: #{tpu_custom_call.1} parent=1 // pred_check
      _
    $region11: #{tpu_custom_call.1} parent=1 // pred_check_branch
      %24 = sbr.rel (0) target = $region13
    $region12: #{tpu_custom_call.1} parent=1 // pred_region
      %25 = dma.done [#allocation3], 64
    $region13: #{tpu_custom_call.1} parent=1 // pred_fallthru
      _
    %v26 = vld [vmem:[#allocation2] sm:$0x3]
    %v27 = vld [vmem:[#allocation2 + $0x2] sm:$0x3]
    %v28 = vld [vmem:[%s1] sm:$0x3]
    %v29 = vadd.f32 %v26, %v28
    %v30 = vadd.f32 %v27, %v28
    %v31 = vlaneseq
    %vm32 = vcmp.ge.s32.totalorder %v31, 0
    %vm33 = vcmp.lt.s32.totalorder %v31, 256
    %vm34 = vmand %vm32, %vm33
    %35 = vst.msk [vmem:[#allocation5] sm:$0x3] %vm34, %v29
    %36 = vst.msk [vmem:[#allocation5 + $0x2] sm:$0x3] %vm34, %v30
    // Predicated region
    $region14: #{tpu_custom_call.1} parent=1 // pred_check
      _
    $region15: #{tpu_custom_call.1} parent=1 // pred_check_branch
      %38 = sbr.rel (0) target = $region17
    $region16: #{tpu_custom_call.1} parent=1 // pred_region
      %s40 = ssub.s32 64, 64
      %41 = vsyncadd [#allocation4], %s40
      %s42 = sshll.u32 [#allocation5], 4
      %s43 = int_to_ptr.vmem [resolvable:$true] %s42
      %48 = dma.vmem_to_hbm [thread:$0]  %s43, 64, %s2, [#allocation4], 32, 32, 2
    $region17: #{tpu_custom_call.1} parent=1 // pred_fallthru
      _
    // Predicated region
    $region18: #{tpu_custom_call.1} parent=1 // pred_check
      _
    $region19: #{tpu_custom_call.1} parent=1 // pred_check_branch
      %50 = sbr.rel (0) target = $region21
    $region20: #{tpu_custom_call.1} parent=1 // pred_region
      %51 = dma.done [#allocation4], 64
    $region21: #{tpu_custom_call.1} parent=1 // pred_fallthru
      _
    %52 = vsyncpa [#allocation3], 1
    %53 = vsyncpa [#allocation4], 1

</llo_original>
